<compile_context>
chip_gen: v5e
topology: v5e:2x2
jax: 0.10.0
libtpu: 0.0.40
codegen_flags: <defaults>
</compile_context>

<pallas_src>
import functools
import math

import jax
import jax.numpy as jnp
from jax.experimental import pallas as pl
from jax.experimental.pallas import tpu as pltpu

_F32 = jnp.float32
_BF16 = jnp.bfloat16

# 512-row tiles sit near the HBM roofline for the mem-bound row kernels on
# v5e/v6e; re-derive against the 64 MiB VMEM budget for very large D on v7x.
_ROW_TILE = 512


def _row_tile(n, target=_ROW_TILE):
    return n if n <= target else target


def _resident_spec(block_shape, index_map):
    """Grid-invariant block (constant index_map): single-buffer it if supported."""
    try:
        return pl.BlockSpec(block_shape, index_map, pipeline_mode=pl.Buffered(1))
    except (AttributeError, TypeError):
        return pl.BlockSpec(block_shape, index_map)


def _mosaic_params(semantics, est_vmem_bytes):
    # Explicit scoped-VMEM limit; clamp to 64 MiB so the same value is safe on
    # v7x (raise toward ~112 MiB on v5e/v6e for very large resident weights).
    limit = int(min(max(est_vmem_bytes + (16 << 20), 32 << 20), 64 << 20))
    return pltpu.CompilerParams(dimension_semantics=semantics,
                                vmem_limit_bytes=limit)


# ----------------------------- Pallas kernels -----------------------------

def _linear_kernel(x_ref, w_ref, b_ref, o_ref):
    acc = jnp.dot(x_ref[...].astype(_BF16), w_ref[...],
                  preferred_element_type=_F32)
    o_ref[...] = (acc + b_ref[...]).astype(o_ref.dtype)


def linear(x, w, b):
    # x: (N, Din) f32, w: (Din, Dout) bf16 (stored), b: (Dout,) f32
    N, Din = x.shape
    Dout = w.shape[1]
    tn = _row_tile(N)
    est = (w.size * w.dtype.itemsize + 4 * Dout
           + 2 * 2 * 4 * tn * (Din + Dout))
    return pl.pallas_call(
        _linear_kernel,
        out_shape=jax.ShapeDtypeStruct((N, Dout), x.dtype),
        grid=(pl.cdiv(N, tn),),
        in_specs=[
            pl.BlockSpec((tn, Din), lambda i: (i, 0)),
            _resident_spec((Din, Dout), lambda i: (0, 0)),   # weights VMEM-resident
            _resident_spec((1, Dout), lambda i: (0, 0)),
        ],
        out_specs=pl.BlockSpec((tn, Dout), lambda i: (i, 0)),
        compiler_params=_mosaic_params(("parallel",), est),
    )(x, w, b.reshape(1, Dout))


def _layer_norm(y, g, bb, eps):
    # One-pass statistics: var = E[y^2] - mean^2 (biased, like torch LN).
    mean = jnp.mean(y, axis=-1, keepdims=True)
    var = jnp.mean(y * y, axis=-1, keepdims=True) - mean * mean
    yhat = (y - mean) * jax.lax.rsqrt(var + eps)
    return yhat * g + bb


def _proj_add_ln_kernel(x_ref, res_ref, w_ref, b_ref, g_ref, bb_ref, o_ref, *, eps):
    y = jnp.dot(x_ref[...].astype(_BF16), w_ref[...],
                preferred_element_type=_F32)
    y = y + b_ref[...] + res_ref[...].astype(_F32)
    o_ref[...] = _layer_norm(y, g_ref[...], bb_ref[...], eps).astype(o_ref.dtype)


def proj_add_ln(x, w, b, res, gamma, beta, eps=1e-5):
    # LayerNorm(res + x @ w + b), row-tiled; out-proj fused with residual + LN.
    N, Din = x.shape
    Dout = w.shape[1]
    tn = _row_tile(N)
    est = (w.size * w.dtype.itemsize + 3 * 4 * Dout
           + 2 * 2 * 4 * tn * (Din + 2 * Dout))
    kernel = functools.partial(_proj_add_ln_kernel, eps=eps)
    return pl.pallas_call(
        kernel,
        out_shape=jax.ShapeDtypeStruct((N, Dout), x.dtype),
        grid=(pl.cdiv(N, tn),),
        in_specs=[
            pl.BlockSpec((tn, Din), lambda i: (i, 0)),
            pl.BlockSpec((tn, Dout), lambda i: (i, 0)),
            _resident_spec((Din, Dout), lambda i: (0, 0)),
            _resident_spec((1, Dout), lambda i: (0, 0)),
            _resident_spec((1, Dout), lambda i: (0, 0)),
            _resident_spec((1, Dout), lambda i: (0, 0)),
        ],
        out_specs=pl.BlockSpec((tn, Dout), lambda i: (i, 0)),
        compiler_params=_mosaic_params(("parallel",), est),
    )(x, res, w, b.reshape(1, Dout), gamma.reshape(1, Dout), beta.reshape(1, Dout))


def _ffn_add_ln_kernel(x_ref, w1_ref, b1_ref, w2_ref, b2_ref, g_ref, bb_ref, o_ref,
                       *, eps):
    x = x_ref[...]
    h = jnp.dot(x.astype(_BF16), w1_ref[...], preferred_element_type=_F32)
    h = jnp.maximum(h + b1_ref[...], 0.0).astype(_BF16)     # ReLU, bf16 MXU operand
    y = jnp.dot(h, w2_ref[...], preferred_element_type=_F32) + b2_ref[...]
    y = y + x.astype(_F32)                                   # residual = FFN input
    o_ref[...] = _layer_norm(y, g_ref[...], bb_ref[...], eps).astype(o_ref.dtype)


def ffn_add_ln(x, w1, b1, w2, b2, gamma, beta, eps=1e-5):
    # LayerNorm(x + relu(x@W1+b1)@W2+b2); bf16 weights stay VMEM-resident,
    # single-buffered.  TODO(synk): K-tile the hidden dim for huge d_ff on v7x.
    N, D = x.shape
    Dh = w1.shape[1]
    tn = _row_tile(N)
    est = ((w1.size + w2.size) * w1.dtype.itemsize + 4 * (Dh + 3 * D)
           + 2 * 2 * 4 * tn * 2 * D)
    kernel = functools.partial(_ffn_add_ln_kernel, eps=eps)
    return pl.pallas_call(
        kernel,
        out_shape=jax.ShapeDtypeStruct((N, D), x.dtype),
        grid=(pl.cdiv(N, tn),),
        in_specs=[
            pl.BlockSpec((tn, D), lambda i: (i, 0)),
            _resident_spec((D, Dh), lambda i: (0, 0)),
            _resident_spec((1, Dh), lambda i: (0, 0)),
            _resident_spec((Dh, D), lambda i: (0, 0)),
            _resident_spec((1, D), lambda i: (0, 0)),
            _resident_spec((1, D), lambda i: (0, 0)),
            _resident_spec((1, D), lambda i: (0, 0)),
        ],
        out_specs=pl.BlockSpec((tn, D), lambda i: (i, 0)),
        compiler_params=_mosaic_params(("parallel",), est),
    )(x, w1, b1.reshape(1, Dh), w2, b2.reshape(1, D),
      gamma.reshape(1, D), beta.reshape(1, D))


def _mha_compute(q2d, k2d, v2d, bias, *, scale, num_heads, need_weights):
    """Per-batch multi-head attention on 2-D (T, D) values; heads via lane slices."""
    D = q2d.shape[-1]
    dh = D // num_heads
    ctx_heads = []
    w_acc = None
    # Static unroll over heads; each head is a plain 2-D MXU matmul.
    # TODO(synk): flash-tile Tk / pack heads for long sequences and large dh.
    for h in range(num_heads):
        sl = slice(h * dh, (h + 1) * dh)
        q = q2d[:, sl].astype(_BF16)
        k = k2d[:, sl].astype(_BF16)
        v = v2d[:, sl].astype(_BF16)
        s = jnp.dot(q, k.T, preferred_element_type=_F32) * scale + bias
        m = jnp.max(s, axis=-1, keepdims=True)
        e = jnp.exp(s - m)
        p = e / jnp.sum(e, axis=-1, keepdims=True)   # exact softmax (returned weights)
        ctx_heads.append(jnp.dot(p.astype(_BF16), v, preferred_element_type=_F32))
        if need_weights:
            w_acc = p if w_acc is None else w_acc + p
    ctx = jnp.concatenate(ctx_heads, axis=-1)        # (Tq, D), lane-dense
    w_avg = None if w_acc is None else w_acc * (1.0 / num_heads)
    return ctx, w_avg


def _self_attn_kernel(qkv_ref, kpb_ref, am_ref, ctx_ref, *w_refs,
                      scale, num_heads, need_weights):
    D = ctx_ref.shape[-1]
    full = qkv_ref[...]                              # (Tq, 3D) fused QKV block
    bias = kpb_ref[...] + am_ref[...]                # (Tq, Tk) built in-kernel
    ctx, w = _mha_compute(full[:, :D], full[:, D:2 * D], full[:, 2 * D:], bias,
                          scale=scale, num_heads=num_heads,
                          need_weights=need_weights)
    ctx_ref[...] = ctx.astype(ctx_ref.dtype)
    if need_weights:
        w_refs[0][...] = w.astype(w_refs[0].dtype)


def _cross_attn_kernel(q_ref, kv_ref, kpb_ref, am_ref, ctx_ref, *w_refs,
                       scale, num_heads, need_weights):
    D = ctx_ref.shape[-1]
    kv = kv_ref[...]                                 # (Tk, 2D) fused KV block
    bias = kpb_ref[...] + am_ref[...]
    ctx, w = _mha_compute(q_ref[...], kv[:, :D], kv[:, D:], bias,
                          scale=scale, num_heads=num_heads,
                          need_weights=need_weights)
    ctx_ref[...] = ctx.astype(ctx_ref.dtype)
    if need_weights:
        w_refs[0][...] = w.astype(w_refs[0].dtype)


# --------------------------- module composition ---------------------------

def multihead_attention(q_in, kv_in, p, num_heads, key_padding_mask=None,
                        attn_mask=None, self_attention=False, need_weights=True):
    """Projections + scaled-dot-product attention.

    Returns (ctx_flat, weights): ctx is pre-output-projection (B*Tq, D) so the
    caller fuses the output projection with residual add + LayerNorm; weights
    are head-averaged softmax probabilities (B, Tq, Tk) or None.
    """
    B, Tq, D = q_in.shape
    Tk = kv_in.shape[1]
    dh = D // num_heads
    scale = 1.0 / math.sqrt(dh)

    if self_attention:
        # Fused QKV projection, consumed directly by the kernel (no XLA slices).
        qkv = linear(q_in.reshape(B * Tq, D), p["w_qkv"], p["b_qkv"])
        operands = [qkv.reshape(B, Tq, 3 * D)]
        in_specs = [pl.BlockSpec((None, Tq, 3 * D), lambda b: (b, 0, 0))]
        kernel_fn = _self_attn_kernel
    else:
        q = linear(q_in.reshape(B * Tq, D), p["wq"], p["bq"])
        kv = linear(kv_in.reshape(B * Tk, D), p["w_kv"], p["b_kv"])
        operands = [q.reshape(B, Tq, D), kv.reshape(B, Tk, 2 * D)]
        in_specs = [pl.BlockSpec((None, Tq, D), lambda b: (b, 0, 0)),
                    pl.BlockSpec((None, Tk, 2 * D), lambda b: (b, 0, 0))]
        kernel_fn = _cross_attn_kernel

    # Tiny per-batch key-padding bias (B, 1, Tk) + shared additive mask (Tq, Tk);
    # the (B, Tq, Tk) bias is never materialized in HBM.
    if key_padding_mask is not None:
        kp_bias = jnp.where(key_padding_mask, -1e9, 0.0).astype(_F32).reshape(B, 1, Tk)
    else:
        kp_bias = jnp.zeros((B, 1, Tk), _F32)
    attn_bias = (attn_mask.astype(_F32) if attn_mask is not None
                 else jnp.zeros((Tq, Tk), _F32))
    operands += [kp_bias, attn_bias]
    in_specs += [pl.BlockSpec((None, 1, Tk), lambda b: (b, 0, 0)),
                 _resident_spec((Tq, Tk), lambda b: (0, 0))]

    kernel = functools.partial(kernel_fn, scale=scale, num_heads=num_heads,
                               need_weights=need_weights)

    ctx_shape = jax.ShapeDtypeStruct((B, Tq, D), _F32)
    ctx_spec = pl.BlockSpec((None, Tq, D), lambda b: (b, 0, 0))
    if need_weights:
        out_shape = (ctx_shape, jax.ShapeDtypeStruct((B, Tq, Tk), _F32))
        out_specs = (ctx_spec, pl.BlockSpec((None, Tq, Tk), lambda b: (b, 0, 0)))
    else:
        out_shape = ctx_shape
        out_specs = ctx_spec

    est = 2 * 4 * (Tq * 3 * D + Tk * 2 * D + Tk + Tq * Tk + Tq * D + Tq * Tk)
    out = pl.pallas_call(
        kernel,
        grid=(B,),
        out_shape=out_shape,
        in_specs=in_specs,
        out_specs=out_specs,
        compiler_params=_mosaic_params(("parallel",), est),
    )(*operands)

    if need_weights:
        ctx, weights = out
    else:
        ctx, weights = out, None
    return ctx.reshape(B * Tq, D), weights


def transformer_decoder_layer(params, x, mask, encoder_out=None,
                              encoder_mask=None, self_attn_mask=None,
                              num_heads=4, eps=1e-5):
    # dropout p = 0.0 (eval) -> identity
    B, T, D = x.shape
    res = x
    has_cross = encoder_out is not None

    # Self-attention weights are only needed if they are actually returned.
    ctx, weight = multihead_attention(
        x, x, params["self_attn"], num_heads,
        key_padding_mask=mask, attn_mask=self_attn_mask,
        self_attention=True, need_weights=not has_cross)
    x = proj_add_ln(ctx, params["self_attn"]["wo"], params["self_attn"]["bo"],
                    res.reshape(B * T, D),
                    params["sa_ln_g"], params["sa_ln_b"], eps).reshape(B, T, D)

    if has_cross:
        if encoder_mask is not None:
            encoder_mask = encoder_mask.astype(bool)
        res = x
        ctx, weight = multihead_attention(
            x, encoder_out, params["enc_attn"], num_heads,
            key_padding_mask=encoder_mask, self_attention=False,
            need_weights=True)
        x = proj_add_ln(ctx, params["enc_attn"]["wo"], params["enc_attn"]["bo"],
                        res.reshape(B * T, D),
                        params["ea_ln_g"], params["ea_ln_b"], eps).reshape(B, T, D)

    x = ffn_add_ln(x.reshape(B * T, D),
                   params["w1"], params["b1"], params["w2"], params["b2"],
                   params["final_ln_g"], params["final_ln_b"], eps).reshape(B, T, D)
    return x, weight


# ------------------------------ param init --------------------------------

def _init_attn_params(key, d_model, self_attention):
    ks = jax.random.split(key, 4)

    def w(k):
        return jax.random.normal(k, (d_model, d_model), _F32) * 0.02

    wq, wk, wv, wo = w(ks[0]), w(ks[1]), w(ks[2]), w(ks[3])
    zeros = jnp.zeros((d_model,), _F32)
    p = {"wo": wo.astype(_BF16), "bo": zeros}
    if self_attention:
        # Pre-fused at init time: no per-forward concatenation traffic.
        p["w_qkv"] = jnp.concatenate([wq, wk, wv], axis=1).astype(_BF16)
        p["b_qkv"] = jnp.zeros((3 * d_model,), _F32)
    else:
        p["wq"] = wq.astype(_BF16)
        p["bq"] = zeros
        p["w_kv"] = jnp.concatenate([wk, wv], axis=1).astype(_BF16)
        p["b_kv"] = jnp.zeros((2 * d_model,), _F32)
    return p


def init_params(key, d_model):
    k1, k2, k3, k4 = jax.random.split(key, 4)
    dff = d_model << 1
    return {
        "self_attn": _init_attn_params(k1, d_model, self_attention=True),
        "sa_ln_g": jnp.ones((d_model,), _F32),
        "sa_ln_b": jnp.zeros((d_model,), _F32),
        "enc_attn": _init_attn_params(k2, d_model, self_attention=False),
        "ea_ln_g": jnp.ones((d_model,), _F32),
        "ea_ln_b": jnp.zeros((d_model,), _F32),
        "w1": (jax.random.normal(k3, (d_model, dff), _F32) * 0.02).astype(_BF16),
        "b1": jnp.zeros((dff,), _F32),
        "w2": (jax.random.normal(k4, (dff, d_model), _F32) * 0.02).astype(_BF16),
        "b2": jnp.zeros((d_model,), _F32),
        "final_ln_g": jnp.ones((d_model,), _F32),
        "final_ln_b": jnp.zeros((d_model,), _F32),
    }


# --------------------------------- main ------------------------------------

if __name__ == "__main__":
    B, T, S, D, H = 2, 8, 12, 32, 4

    root = jax.random.PRNGKey(0)
    kp, kx, ke = jax.random.split(root, 3)

    params = init_params(kp, D)
    x = jax.random.normal(kx, (B, T, D), _F32)
    encoder_out = jax.random.normal(ke, (B, S, D), _F32)

    # key padding masks: True = padded (ignored)
    mask = jnp.zeros((B, T), bool).at[1, T - 1].set(True)
    encoder_mask = jnp.zeros((B, S), bool).at[0, S - 2:].set(True)

    # causal additive self-attention mask (T, T)
    causal = jnp.where(
        jnp.triu(jnp.ones((T, T), bool), k=1), -1e9, 0.0
    ).astype(_F32)

    out, weight = transformer_decoder_layer(
        params, x, mask,
        encoder_out=encoder_out, encoder_mask=encoder_mask,
        self_attn_mask=causal, num_heads=H,
    )
    jax.block_until_ready((out, weight))

    assert out.shape == (B, T, D)
    assert weight.shape == (B, T, S)
    assert bool(jnp.all(jnp.isfinite(out))) and bool(jnp.all(jnp.isfinite(weight)))
    print("KERNEL_OK")
</pallas_src>

<mosaic_0001>
module attributes {stable_mosaic.version = 11 : i64} {
  func.func @_linear_kernel(%arg0: i32, %arg1: memref<16x32xf32, #tpu.memory_space<vmem>>, %arg2: memref<32x96xbf16, #tpu.memory_space<vmem>>, %arg3: memref<1x96xf32, #tpu.memory_space<vmem>>, %arg4: memref<16x96xf32, #tpu.memory_space<vmem>>) attributes {dimension_semantics = [#tpu.dimension_semantics<parallel>], iteration_bounds = array<i64: 1>, scalar_prefetch = 0 : i64, scratch_operands = 0 : i64, tpu.core_type = #tpu.core_type<tc>, window_params = [{transform_indices = @transform_0, window_bounds = array<i64: 16, 32>}, {pipeline_mode = #tpu.pipeline_mode<synchronous>, transform_indices = @transform_1, window_bounds = array<i64: 32, 96>}, {pipeline_mode = #tpu.pipeline_mode<synchronous>, transform_indices = @transform_2, window_bounds = array<i64: 1, 96>}, {transform_indices = @transform_3, window_bounds = array<i64: 16, 96>}]} {
    %c0 = arith.constant 0 : index
    %c0_0 = arith.constant 0 : index
    %0 = vector.load %arg1[%c0, %c0_0] : memref<16x32xf32, #tpu.memory_space<vmem>>, vector<16x32xf32>
    %1 = arith.truncf %0 : vector<16x32xf32> to vector<16x32xbf16>
    %c0_1 = arith.constant 0 : index
    %c0_2 = arith.constant 0 : index
    %2 = vector.load %arg2[%c0_1, %c0_2] : memref<32x96xbf16, #tpu.memory_space<vmem>>, vector<32x96xbf16>
    %cst = arith.constant dense<0.000000e+00> : vector<16x96xf32>
    %3 = tpu.matmul %1, %2, %cst {dimension_numbers = #tpu.dot_dimension_numbers<[1], [0], [0], [1], [0, 0, 1, 1], [], []>} : vector<16x32xbf16>, vector<32x96xbf16>, vector<16x96xf32> -> vector<16x96xf32>
    %c0_3 = arith.constant 0 : index
    %c0_4 = arith.constant 0 : index
    %4 = vector.load %arg3[%c0_3, %c0_4] : memref<1x96xf32, #tpu.memory_space<vmem>>, vector<1x96xf32>
    %5 = vector.broadcast %4 : vector<1x96xf32> to vector<16x96xf32>
    %6 = arith.addf %3, %5 : vector<16x96xf32>
    %c0_5 = arith.constant 0 : index
    %c0_6 = arith.constant 0 : index
    %7 = vector.load %arg4[%c0_5, %c0_6] : memref<16x96xf32, #tpu.memory_space<vmem>>, vector<16x96xf32>
    tpu.vector_store %arg4[%c0_5, %c0_6], %6 {strides = array<i32>} : memref<16x96xf32, #tpu.memory_space<vmem>>, vector<16x96xf32>,
    return
  }
  func.func @transform_0(%arg0: i32) -> (i32, i32) {
    %c0_i32 = arith.constant 0 : i32
    %c0_i32_0 = arith.constant 0 : i32
    return %arg0, %c0_i32 : i32, i32
  }
  func.func @transform_1(%arg0: i32) -> (i32, i32) {
    %c0_i32 = arith.constant 0 : i32
    %c0_i32_0 = arith.constant 0 : i32
    %c0_i32_1 = arith.constant 0 : i32
    return %c0_i32, %c0_i32_0 : i32, i32
  }
  func.func @transform_2(%arg0: i32) -> (i32, i32) {
    %c0_i32 = arith.constant 0 : i32
    %c0_i32_0 = arith.constant 0 : i32
    %c0_i32_1 = arith.constant 0 : i32
    return %c0_i32, %c0_i32_0 : i32, i32
  }
  func.func @transform_3(%arg0: i32) -> (i32, i32) {
    %c0_i32 = arith.constant 0 : i32
    %c0_i32_0 = arith.constant 0 : i32
    return %arg0, %c0_i32 : i32, i32
  }
}

</mosaic_0001>

<llo_original>
// kernel: tpu_custom_call.1
$region0: #{tpu_custom_call.1}
  #allocation0 [shape = 'u32[]', space=smem, size = 0x4, offset = 0x4, fixed_abs, tag = 'smem constant byte address 0x4 - core index']
  #allocation1 [shape = 'u32[72,128]{1,0:T(1,128)}', space=vmem, size = 0x9000, scoped, tag = 'internal scratch']
  %s0 = inlined_call_operand.hbm [shape: f32[16,32], index: 0, kind: input, shape index: {}]
  %s1 = inlined_call_operand.hbm [shape: bf16[32,96], index: 1, kind: input, shape index: {}]
  %s2 = inlined_call_operand.vmem [shape: f32[1,96], index: 2, kind: input, shape index: {}]
  %s3 = inlined_call_operand.hbm [shape: f32[16,96], index: 3, kind: output, shape index: {}]
  %s4 = sld [smem:[#allocation0]]
  $region30: #{tpu_custom_call.1} parent=0
    _
  %s6 = ssub.s32 1, %s4
  %s7 = scalar_select 0, %s6, %s4
  $region1: #{tpu_custom_call.1} parent=0
    #allocation2 [shape = 'u8[8192]{0}', space=vmem, size = 0x2000, scoped, tag = 'input window, operand 0, single buffered']
    #allocation3 [shape = 's32[1]{0}', space=sflag, size = 0x4, scoped, tag = 'scoped memory for tpu_custom_call.1']
    #allocation4 [shape = 's32[1]{0}', space=sflag, size = 0x4, scoped, tag = 'scoped memory for tpu_custom_call.1']
    #allocation5 [shape = 'u8[8192]{0}', space=vmem, size = 0x2000, scoped, tag = 'input window, operand 1, single buffered']
    #allocation6 [shape = 's32[1]{0}', space=sflag, size = 0x4, scoped, tag = 'scoped memory for tpu_custom_call.1']
    #allocation7 [shape = 'u8[8192]{0}', space=vmem, size = 0x2000, scoped, tag = 'output window, operand 0, single buffered']
    %8 = vsyncpa [#allocation3], 0
    %9 = vsyncpa [#allocation6], 0
    %10 = vsyncpa [#allocation4], 0
    // Predicated region
    $region2: #{tpu_custom_call.1} parent=1 // pred_check
      _
    $region3: #{tpu_custom_call.1} parent=1 // pred_check_branch
      %12 = sbr.rel (0) target = $region5
    $region4: #{tpu_custom_call.1} parent=1 // pred_region
      %14 = vsyncadd [#allocation3], 0
      %s15 = sshll.u32 %s0, 4
      %s16 = int_to_ptr.hbm [resolvable:$true] %s15
      %s17 = sshll.u32 [#allocation2], 4
      %s18 = int_to_ptr.vmem [resolvable:$true] %s17
      %23 = dma.hbm_to_vmem [thread:$0]  %s16, 256, %s18, [#allocation3], 128, 128, 8
    $region5: #{tpu_custom_call.1} parent=1 // pred_fallthru
      _
    // Predicated region
    $region6: #{tpu_custom_call.1} parent=1 // pred_check
      _
    $region7: #{tpu_custom_call.1} parent=1 // pred_check_branch
      %25 = sbr.rel (0) target = $region9
    $region8: #{tpu_custom_call.1} parent=1 // pred_region
      %27 = vsyncadd [#allocation6], 0
      %s28 = sshll.u32 %s1, 4
      %s29 = int_to_ptr.hbm [resolvable:$true] %s28
      %s30 = sshll.u32 [#allocation5], 4
      %s31 = int_to_ptr.vmem [resolvable:$true] %s30
      %36 = dma.hbm_to_vmem [thread:$0]  %s29, 256, %s31, [#allocation6], 64, 64, 4
    $region9: #{tpu_custom_call.1} parent=1 // pred_fallthru
      _
    // Predicated region
    $region10: #{tpu_custom_call.1} parent=1 // pred_check
      _
    $region11: #{tpu_custom_call.1} parent=1 // pred_check_branch
      %38 = sbr.rel (0) target = $region13
    $region12: #{tpu_custom_call.1} parent=1 // pred_region
      _
    $region13: #{tpu_custom_call.1} parent=1 // pred_fallthru
      _
    // Predicated region
    $region14: #{tpu_custom_call.1} parent=1 // pred_check
      _
    $region15: #{tpu_custom_call.1} parent=1 // pred_check_branch
      %40 = sbr.rel (0) target = $region17
    $region16: #{tpu_custom_call.1} parent=1 // pred_region
      %42 = dma.done [#allocation3], 256
    $region17: #{tpu_custom_call.1} parent=1 // pred_fallthru
      _
    // Predicated region
    $region18: #{tpu_custom_call.1} parent=1 // pred_check
      _
    $region19: #{tpu_custom_call.1} parent=1 // pred_check_branch
      %44 = sbr.rel (0) target = $region21
    $region20: #{tpu_custom_call.1} parent=1 // pred_region
      %46 = dma.done [#allocation6], 256
    $region21: #{tpu_custom_call.1} parent=1 // pred_fallthru
      _
    %v48 = vld [vmem:[#allocation2] sm:$0xff]
    %v49 = vld [vmem:[#allocation2 + $0x8] sm:$0xff]
    %v50 = vpack.c.bf16 %v49, %v48
    %v51 = vld [vmem:[#allocation5] sm:$0xf]
    %v52 = vld [vmem:[#allocation5 + $0x4] sm:$0xf]
    %v53 = vld [vmem:[#allocation5 + $0x8] sm:$0xf]
    %v54 = vld [vmem:[#allocation5 + $0xc] sm:$0xf]
    %v55 = vld [vmem:[%s2] sm:$0x1]
    %v57 = vperm.slane %v55, 0
    %v63 = vunpack.c.l.b16 %v51
    %v64 = vunpack.c.l.b16 %v52
    %v65 = vunpack.c.l.b16 %v53
    %v66 = vunpack.c.l.b16 %v54
    %v67 = vpack.c.b16 %v64, %v63
    %v68 = vpack.c.b16 %v66, %v65
    %vm71 = vcmask 261120
    %v73 = vsel %vm71, %v50, 0
    %75 = vmatpush.bf16.msra.mxu0 0
    %76 = vmatpush.bf16.msra.mxu0 0
    %77 = vmatpush.bf16.msra.mxu0 0
    %78 = vmatpush.bf16.msra.mxu0 0
    %79 = vmatpush.bf16.msra.mxu0 0
    %80 = vmatpush.bf16.msra.mxu0 0
    %81 = vmatpush.bf16.msra.mxu0 %v68
    %82 = vmatpush.bf16.msra.mxu0 %v67
    %83 = vmatmul.bf16.gmra.mxu0 %v73
    %v84 = vpop.f32.mrf.mxu0
    %v85 = vadd.f32 %v57, %v84
    %v86 = vpop.f32.mrf.mxu0
    %v87 = vadd.f32 %v57, %v86
    %88 = vdwg.mxu0
    %vm89 = vcmask 785408
    %90 = vst.msk [vmem:[#allocation7] sm:$0xff] %vm89, %v85
    %91 = vst.msk [vmem:[#allocation7 + $0x8] sm:$0xff] %vm89, %v87
    // Predicated region
    $region22: #{tpu_custom_call.1} parent=1 // pred_check
      _
    $region23: #{tpu_custom_call.1} parent=1 // pred_check_branch
      %93 = sbr.rel (0) target = $region25
    $region24: #{tpu_custom_call.1} parent=1 // pred_region
      %95 = vsyncadd [#allocation4], 0
      %s96 = sshll.u32 [#allocation7], 4
      %s97 = int_to_ptr.vmem [resolvable:$true] %s96
      %s98 = sshll.u32 %s3, 4
      %s99 = int_to_ptr.hbm [resolvable:$true] %s98
      %104 = dma.vmem_to_hbm [thread:$0]  %s97, 256, %s99, [#allocation4], 128, 128, 8
    $region25: #{tpu_custom_call.1} parent=1 // pred_fallthru
      _
    // Predicated region
    $region26: #{tpu_custom_call.1} parent=1 // pred_check
      _
    $region27: #{tpu_custom_call.1} parent=1 // pred_check_branch
      %106 = sbr.rel (0) target = $region29
    $region28: #{tpu_custom_call.1} parent=1 // pred_region
      %108 = dma.done [#allocation4], 256
    $region29: #{tpu_custom_call.1} parent=1 // pred_fallthru
      _
    %109 = vsyncpa [#allocation3], 1
    %110 = vsyncpa [#allocation6], 1
    %111 = vsyncpa [#allocation4], 1

</llo_original>
